<compile_context>
chip_gen: v7x
topology: tpu7x:2x2x1
jax: 0.10.0
libtpu: 0.0.40
codegen_flags: <defaults>
</compile_context>

<pallas_src>
import functools

import jax
import jax.numpy as jnp
from jax import lax
from jax.experimental import pallas as pl
from jax.experimental.pallas import tpu as pltpu


def _round_up(a, b):
    return (a + b - 1) // b * b


def _biasfree_ln_kernel(x_ref, w_ref, o_ref, *, inv_c):
    # x_ref: (tile_r, C) tile, w_ref: (1, C) resident weight, o_ref: (tile_r, C)
    xf = x_ref[...].astype(jnp.float32)
    wf = w_ref[...].astype(jnp.float32)

    # Two-pass variance in fp32: mean, then centered second moment. Matches
    # PyTorch var(unbiased=False) numerics; extra VALU/XLU work is hidden under
    # the HBM bound.
    mean = jnp.sum(xf, axis=-1, keepdims=True) * inv_c
    centered = xf - mean
    var = jnp.sum(centered * centered, axis=-1, keepdims=True) * inv_c
    inv = lax.rsqrt(var + 1e-5)                     # EUP slot, effectively free

    # BiasFree LayerNorm does NOT subtract the mean from x.
    o_ref[...] = (xf * inv * wf).astype(o_ref.dtype)


def _pick_tile_r(n_rows, c, itemsize):
    """Row-tile size.

    Large enough to amortize the ~0.35us per-grid-step cost, small enough that
    2x(in)+2x(out) double-buffered blocks plus ~3 fp32 temporaries fit the VMEM
    budget on every generation, and capped so that when rows are plentiful the
    grid has ~8 steps (pipeline overlap + work for both v7x TensorCores).
    """
    per_row = c * (4 * itemsize + 12)     # 4 dbl-buffered blocks + fp32 temps
    budget = 16 << 20                     # working-set target (vmem_limit=32M)
    t = max(8, (budget // max(per_row, 1)) // 8 * 8)
    if n_rows >= 64:
        t = min(t, max(8, _round_up(pl.cdiv(n_rows, 8), 8)))
    if t >= n_rows:
        return n_rows                     # single full-extent block: always legal
    return t                              # multiple of 8; ragged last block OK


@jax.jit
def biasfree_layernorm(x, weight):
    """x: (..., C), weight: (C,). Returns same shape/dtype as x."""
    orig_shape = x.shape
    C = orig_shape[-1]

    x2 = x.reshape(-1, C)
    R = x2.shape[0]
    w2 = weight.reshape(1, C)             # keep original weight dtype (no downcast)

    itemsize = jnp.dtype(x.dtype).itemsize
    tile_r = _pick_tile_r(R, C, itemsize)
    grid = (pl.cdiv(R, tile_r),)          # ragged last block: OOB writes dropped

    cost = pl.CostEstimate(
        flops=7 * R * C,
        transcendentals=R,
        bytes_accessed=2 * R * C * itemsize + C * jnp.dtype(weight.dtype).itemsize,
    )

    out = pl.pallas_call(
        functools.partial(_biasfree_ln_kernel, inv_c=1.0 / float(C)),
        out_shape=jax.ShapeDtypeStruct((R, C), x.dtype),
        grid_spec=pltpu.PrefetchScalarGridSpec(
            num_scalar_prefetch=0,
            grid=grid,
            in_specs=[
                pl.BlockSpec((tile_r, C), lambda i: (i, 0)),
                pl.BlockSpec((1, C), lambda i: (0, 0)),   # weight stays resident
            ],
            out_specs=pl.BlockSpec((tile_r, C), lambda i: (i, 0)),
        ),
        compiler_params=pltpu.CompilerParams(
            dimension_semantics=("parallel",),
            vmem_limit_bytes=32 << 20,
        ),
        cost_estimate=cost,
    )(x2, w2)

    return out.reshape(orig_shape)


def _reference(x, weight):
    # Pure-JAX reference mirroring the PyTorch forward (fp32 math).
    xf = x.astype(jnp.float32)
    sigma = jnp.var(xf, axis=-1, keepdims=True)
    return (xf / jnp.sqrt(sigma + 1e-5) * weight.astype(jnp.float32)).astype(x.dtype)


if __name__ == "__main__":
    key = jax.random.PRNGKey(0)

    # Small shape consistent with the module: batch=2, seq=8, hidden=32.
    B, N, C = 2, 8, 32
    x = jax.random.normal(key, (B, N, C), dtype=jnp.float32)
    weight = jnp.ones((C,), dtype=jnp.float32)   # nn.Parameter(torch.ones(C))

    out = jax.block_until_ready(biasfree_layernorm(x, weight))
    assert out.shape == x.shape and out.dtype == x.dtype
    assert jnp.allclose(out, _reference(x, weight), atol=1e-5, rtol=1e-5), \
        "mismatch vs reference (fp32)"

    # Ragged rows + non-multiple-of-128 channels: exercises the no-pad masked path.
    C2 = 48
    w2 = jnp.ones((C2,), dtype=jnp.float32)
    x2 = jax.random.normal(jax.random.PRNGKey(1), (3, 37, C2), dtype=jnp.float32)
    out2 = jax.block_until_ready(biasfree_layernorm(x2, w2))
    assert jnp.allclose(out2, _reference(x2, w2), atol=1e-5, rtol=1e-5), \
        "mismatch vs reference (ragged/odd-C)"

    # bf16 activations with fp32 weight: fp32 math, bf16 store.
    x3 = jax.random.normal(jax.random.PRNGKey(2), (4, 24, 128), dtype=jnp.bfloat16)
    w3 = jnp.ones((128,), dtype=jnp.float32)
    out3 = jax.block_until_ready(biasfree_layernorm(x3, w3))
    ref3 = _reference(x3, w3)
    assert out3.dtype == x3.dtype
    assert jnp.allclose(out3.astype(jnp.float32), ref3.astype(jnp.float32),
                        atol=2e-2, rtol=2e-2), "mismatch vs reference (bf16)"

    print("KERNEL_OK")
</pallas_src>

<mosaic_0001>
module attributes {stable_mosaic.version = 11 : i64} {
  func.func @_biasfree_ln_kernel(%arg0: i32, %arg1: memref<16x32xf32, #tpu.memory_space<vmem>>, %arg2: memref<1x32xf32, #tpu.memory_space<vmem>>, %arg3: memref<16x32xf32, #tpu.memory_space<vmem>>) attributes {dimension_semantics = [#tpu.dimension_semantics<parallel>], iteration_bounds = array<i64: 1>, scalar_prefetch = 0 : i64, scratch_operands = 0 : i64, tpu.core_type = #tpu.core_type<tc>, window_params = [{transform_indices = @transform_0, window_bounds = array<i64: 16, 32>}, {pipeline_mode = #tpu.pipeline_mode<synchronous>, transform_indices = @transform_1, window_bounds = array<i64: 1, 32>}, {transform_indices = @transform_2, window_bounds = array<i64: 16, 32>}]} {
    %c0 = arith.constant 0 : index
    %c0_0 = arith.constant 0 : index
    %0 = vector.load %arg1[%c0, %c0_0] : memref<16x32xf32, #tpu.memory_space<vmem>>, vector<16x32xf32>
    %c0_1 = arith.constant 0 : index
    %c0_2 = arith.constant 0 : index
    %1 = vector.load %arg2[%c0_1, %c0_2] : memref<1x32xf32, #tpu.memory_space<vmem>>, vector<1x32xf32>
    %cst = arith.constant dense<0.000000e+00> : vector<16xf32>
    %2 = vector.multi_reduction <add>, %0, %cst [1] : vector<16x32xf32> to vector<16xf32>
    %3 = vector.shape_cast %2 : vector<16xf32> to vector<16x1xf32>
    %cst_3 = arith.constant 3.125000e-02 : f32
    %4 = vector.broadcast %cst_3 : f32 to vector<16x1xf32>
    %5 = arith.mulf %3, %4 : vector<16x1xf32>
    %6 = vector.broadcast %5 : vector<16x1xf32> to vector<16x32xf32>
    %7 = arith.subf %0, %6 : vector<16x32xf32>
    %8 = arith.mulf %7, %7 : vector<16x32xf32>
    %cst_4 = arith.constant dense<0.000000e+00> : vector<16xf32>
    %9 = vector.multi_reduction <add>, %8, %cst_4 [1] : vector<16x32xf32> to vector<16xf32>
    %10 = vector.shape_cast %9 : vector<16xf32> to vector<16x1xf32>
    %cst_5 = arith.constant 3.125000e-02 : f32
    %11 = vector.broadcast %cst_5 : f32 to vector<16x1xf32>
    %12 = arith.mulf %10, %11 : vector<16x1xf32>
    %cst_6 = arith.constant 9.99999974E-6 : f32
    %13 = vector.broadcast %cst_6 : f32 to vector<16x1xf32>
    %14 = arith.addf %12, %13 : vector<16x1xf32>
    %15 = math.rsqrt %14 : vector<16x1xf32>
    %16 = vector.broadcast %15 : vector<16x1xf32> to vector<16x32xf32>
    %17 = arith.mulf %0, %16 : vector<16x32xf32>
    %18 = vector.broadcast %1 : vector<1x32xf32> to vector<16x32xf32>
    %19 = arith.mulf %17, %18 : vector<16x32xf32>
    %c0_7 = arith.constant 0 : index
    %c0_8 = arith.constant 0 : index
    %20 = vector.load %arg3[%c0_7, %c0_8] : memref<16x32xf32, #tpu.memory_space<vmem>>, vector<16x32xf32>
    tpu.vector_store %arg3[%c0_7, %c0_8], %19 {strides = array<i32>} : memref<16x32xf32, #tpu.memory_space<vmem>>, vector<16x32xf32>,
    return
  }
  func.func @transform_0(%arg0: i32) -> (i32, i32) {
    %c0_i32 = arith.constant 0 : i32
    %c0_i32_0 = arith.constant 0 : i32
    return %arg0, %c0_i32 : i32, i32
  }
  func.func @transform_1(%arg0: i32) -> (i32, i32) {
    %c0_i32 = arith.constant 0 : i32
    %c0_i32_0 = arith.constant 0 : i32
    %c0_i32_1 = arith.constant 0 : i32
    return %c0_i32, %c0_i32_0 : i32, i32
  }
  func.func @transform_2(%arg0: i32) -> (i32, i32) {
    %c0_i32 = arith.constant 0 : i32
    %c0_i32_0 = arith.constant 0 : i32
    return %arg0, %c0_i32 : i32, i32
  }
}

</mosaic_0001>

<llo_original>
// kernel: biasfree_layernorm.1
$region0: #{biasfree_layernorm.1}
  #allocation0 [shape = 'u32[]', space=smem, size = 0x4, offset = 0x4, fixed_abs, tag = 'smem constant byte address 0x4 - core index']
  #allocation1 [shape = 'u32[144,128]{1,0:T(1,128)}', space=vmem, size = 0x12000, scoped, tag = 'internal scratch']
  %s0 = inlined_call_operand.hbm [shape: f32[16,32], index: 0, kind: input, shape index: {}]
  %s1 = inlined_call_operand.vmem [shape: f32[1,32], index: 1, kind: input, shape index: {}]
  %s2 = inlined_call_operand.hbm [shape: f32[16,32], index: 2, kind: output, shape index: {}]
  %s3 = sld [smem:[#allocation0]]
  $region22: #{biasfree_layernorm.1} parent=0
    _
  %s5 = ssub.s32 1, %s3
  %s6 = scalar_select 0, %s5, %s3
  $region1: #{biasfree_layernorm.1} parent=0
    #allocation2 [shape = 'u8[8192]{0}', space=vmem, size = 0x2000, scoped, tag = 'input window, operand 0, single buffered']
    #allocation3 [shape = 's32[1]{0}', space=sflag, size = 0x4, scoped, tag = 'scoped memory for biasfree_layernorm.1']
    #allocation4 [shape = 's32[1]{0}', space=sflag, size = 0x4, scoped, tag = 'scoped memory for biasfree_layernorm.1']
    #allocation5 [shape = 'u8[8192]{0}', space=vmem, size = 0x2000, scoped, tag = 'output window, operand 0, single buffered']
    %7 = vsyncpa [#allocation3], 0
    %8 = vsyncpa [#allocation4], 0
    // Predicated region
    $region2: #{biasfree_layernorm.1} parent=1 // pred_check
      _
    $region3: #{biasfree_layernorm.1} parent=1 // pred_check_branch
      %10 = sbr.rel (0) target = $region5
    $region4: #{biasfree_layernorm.1} parent=1 // pred_region
      %s12 = ssub.s32 256, 256
      %13 = vsyncadd [#allocation3], %s12
      %s14 = sshll.u32 [#allocation2], 4
      %s15 = int_to_ptr.vmem [resolvable:$true] %s14
      %20 = dma.hbm_to_vmem [thread:$0]  %s0, 256, %s15, [#allocation3], 128, 128, 8
    $region5: #{biasfree_layernorm.1} parent=1 // pred_fallthru
      _
    // Predicated region
    $region6: #{biasfree_layernorm.1} parent=1 // pred_check
      _
    $region7: #{biasfree_layernorm.1} parent=1 // pred_check_branch
      %22 = sbr.rel (0) target = $region9
    $region8: #{biasfree_layernorm.1} parent=1 // pred_region
      _
    $region9: #{biasfree_layernorm.1} parent=1 // pred_fallthru
      _
    // Predicated region
    $region10: #{biasfree_layernorm.1} parent=1 // pred_check
      _
    $region11: #{biasfree_layernorm.1} parent=1 // pred_check_branch
      %24 = sbr.rel (0) target = $region13
    $region12: #{biasfree_layernorm.1} parent=1 // pred_region
      %25 = dma.done [#allocation3], 256
    $region13: #{biasfree_layernorm.1} parent=1 // pred_fallthru
      _
    %v26 = vld [vmem:[#allocation2] sm:$0xff]
    %v27 = vld [vmem:[#allocation2 + $0x8] sm:$0xff]
    %v28 = vld [vmem:[%s1] sm:$0x1]
    %vm29 = vcmask 261120
    %v30 = vsel %vm29, %v26, 0.0
    %31 = vadd.xlane.f32.xlu0 %v30
    %v32 = vpop.xlane.xlu0 %31
    %v33 = vsel %vm29, %v27, 0.0
    %34 = vadd.xlane.f32.xlu0 %v33
    %v35 = vpop.xlane.xlu0 %34
    %v36 = vmul.f32 %v32, 0.03125
    %v37 = vmul.f32 %v35, 0.03125
    %v38 = vsub.f32 %v26, %v36
    %v39 = vsub.f32 %v27, %v37
    %v40 = vmul.f32 %v38, %v38
    %v41 = vmul.f32 %v39, %v39
    %v42 = vsel %vm29, %v40, 0.0
    %43 = vadd.xlane.f32.xlu0 %v42
    %v44 = vpop.xlane.xlu0 %43
    %v45 = vsel %vm29, %v41, 0.0
    %46 = vadd.xlane.f32.xlu0 %v45
    %v47 = vpop.xlane.xlu0 %46
    %v48 = vmul.f32 %v44, 0.03125
    %v49 = vmul.f32 %v47, 0.03125
    %v50 = vadd.f32 %v48, 1e-05
    %v51 = vadd.f32 %v49, 1e-05
    %v52 = vrsqrt.pop %v50
    %v53 = vrsqrt.pop %v51
    %v54 = vmul.f32 %v26, %v52
    %v55 = vmul.f32 %v27, %v53
    %v57 = vlaneseq
    %v58 = vshrl.u32 %v57, 7
    %v59 = vsub.s32 0, %v58
    %v60 = vrot.slane %v28, %v59
    %v62 = vmul.f32 %v54, %v60
    %v63 = vmul.f32 %v55, %v60
    %64 = vst.msk [vmem:[#allocation5] sm:$0xff] %vm29, %v62
    %65 = vst.msk [vmem:[#allocation5 + $0x8] sm:$0xff] %vm29, %v63
    // Predicated region
    $region14: #{biasfree_layernorm.1} parent=1 // pred_check
      _
    $region15: #{biasfree_layernorm.1} parent=1 // pred_check_branch
      %67 = sbr.rel (0) target = $region17
    $region16: #{biasfree_layernorm.1} parent=1 // pred_region
      %s69 = ssub.s32 256, 256
      %70 = vsyncadd [#allocation4], %s69
      %s71 = sshll.u32 [#allocation5], 4
      %s72 = int_to_ptr.vmem [resolvable:$true] %s71
      %77 = dma.vmem_to_hbm [thread:$0]  %s72, 256, %s2, [#allocation4], 128, 128, 8
    $region17: #{biasfree_layernorm.1} parent=1 // pred_fallthru
      _
    // Predicated region
    $region18: #{biasfree_layernorm.1} parent=1 // pred_check
      _
    $region19: #{biasfree_layernorm.1} parent=1 // pred_check_branch
      %79 = sbr.rel (0) target = $region21
    $region20: #{biasfree_layernorm.1} parent=1 // pred_region
      %80 = dma.done [#allocation4], 256
    $region21: #{biasfree_layernorm.1} parent=1 // pred_fallthru
      _
    %81 = vsyncpa [#allocation3], 1
    %82 = vsyncpa [#allocation4], 1

</llo_original>
